<compile_context>
chip_gen: v5e
topology: v5e:2x2
jax: 0.10.0
libtpu: 0.0.40
codegen_flags: <defaults>
</compile_context>

<pallas_src>
import functools

import jax
import jax.numpy as jnp
from jax.experimental import pallas as pl
from jax.experimental.pallas import tpu as pltpu


def _device_kind():
    try:
        return jax.devices()[0].device_kind.lower()
    except Exception:
        return ""


def _masked_ce_kernel(x_ref, t_ref, wt_ref, out_ref, m_sc, l_sc, xt_sc, *,
                      total_rows, total_cols, num_row_tiles,
                      row_guard, row_tail, col_tail):
    ci = pl.program_id(0)            # core slot (parallel; sharded on multi-TC chips)
    ti = pl.program_id(1)            # batch tile within core (arbitrary)
    cj = pl.program_id(2)            # class tile (arbitrary, innermost reduction)
    steps = pl.num_programs(1)
    ncj = pl.num_programs(2)

    # per-core packed accumulator: lane 0 = weighted NLL sum, lane 1 = weight sum
    @pl.when((ti == 0) & (cj == 0))
    def _init_out():
        out_ref[...] = jnp.zeros_like(out_ref)

    tile_idx = ci * steps + ti       # logical (unclamped) batch-tile id

    def _body():
        tb, tc = x_ref.shape
        x = x_ref[...]               # (TB, TC) native dtype (bf16 stays bf16)
        t = t_ref[...]               # (TB, 1) int32 labels

        @pl.when(cj == 0)
        def _init_rows():
            m_sc[...] = jnp.full_like(m_sc, -jnp.inf)
            l_sc[...] = jnp.zeros_like(l_sc)
            xt_sc[...] = jnp.zeros_like(xt_sc)

        cols = cj * tc + jax.lax.broadcasted_iota(jnp.int32, (tb, tc), 1)

        # running max (computed on the native tile; cast only the (TB,1) result)
        if col_tail:
            col_ok = cols < total_cols
            fill = jnp.asarray(jnp.finfo(x.dtype).min, x.dtype)
            tile_max = jnp.max(jnp.where(col_ok, x, fill), axis=-1,
                               keepdims=True).astype(jnp.float32)
        else:
            tile_max = jnp.max(x, axis=-1, keepdims=True).astype(jnp.float32)

        m_prev = m_sc[...]
        m_new = jnp.maximum(m_prev, tile_max)

        # single fused f32 pass over the tile (EUP exp + XLU row reduce)
        p = jnp.exp(x.astype(jnp.float32) - m_new)
        if col_tail:
            p = jnp.where(col_ok, p, 0.0)
        p_sum = jnp.sum(p, axis=-1, keepdims=True)

        l_sc[...] = l_sc[...] * jnp.exp(m_prev - m_new) + p_sum
        m_sc[...] = m_new

        # target-logit gather: select on the native tile, cast only (TB,1)
        sel = jnp.where(cols == t, x, jnp.zeros([], x.dtype))
        xt_sc[...] += jnp.sum(sel, axis=-1, keepdims=True).astype(jnp.float32)

        @pl.when(cj == ncj - 1)
        def _finalize():
            nll = m_sc[...] + jnp.log(l_sc[...]) - xt_sc[...]   # (TB, 1)
            wt = wt_ref[...]                # (TB, 1) = mask * weight[target], f32
            num_col = wt * nll
            den_col = wt
            if row_tail:                    # rows past B in the last partial tile
                rows = tile_idx * tb + jax.lax.broadcasted_iota(jnp.int32, (tb, 1), 0)
                ok = rows < total_rows
                num_col = jnp.where(ok, num_col, 0.0)
                den_col = jnp.where(ok, den_col, 0.0)
            num_tile = jnp.sum(num_col)
            den_tile = jnp.sum(den_col)
            lane = jax.lax.broadcasted_iota(jnp.int32, out_ref.shape, 2)
            out_ref[...] += jnp.where(lane == 0, num_tile,
                                      jnp.where(lane == 1, den_tile, 0.0))

    if row_guard:
        # clamped padding tiles (multi-core grid padding) skip all vector work
        pl.when(tile_idx < num_row_tiles)(_body)
    else:
        _body()


def masked_cross_entropy_loss(logits, target, mask, weight, reduction="mean", *,
                              batch_block=None, c_block=None, ncore=None):
    """logits: (B, C) float, target: (B,) int, mask: (B,) bool, weight: (C,) float."""
    b, c = logits.shape
    itemsize = jnp.dtype(logits.dtype).itemsize
    is_v7 = "v7" in _device_kind()

    if ncore is None:
        ncore = 2 if is_v7 else 1          # single TC on v5e/v6e: no padding tiles

    # class tile: full row for modest vocab, multiple-of-128 slab for huge vocab
    if c_block is None:
        tc_cap = 2048 if is_v7 else 4096
        tc = c if c <= tc_cap else tc_cap
    else:
        tc = c_block
    assert tc == c or (tc % 128 == 0 and tc <= c), "c_block must be C or a multiple of 128"

    # batch tile sized against the in-kernel working set (2x double-buffered
    # native tile + ~2 f32-wide fused temporaries), generation-aware budget.
    if batch_block is None:
        budget = (12 if is_v7 else 40) * 1024 * 1024
        bytes_per_row = tc * (2 * itemsize + 8)
        tb = budget // max(1, bytes_per_row)
        tb = max(8, min(1024, (tb // 8) * 8))
        tb = b if b <= tb else tb
    else:
        tb = batch_block
    assert tb == b or tb % 8 == 0, "batch_block must be B or a multiple of 8"

    num_row_tiles = pl.cdiv(b, tb)
    steps_per_core = pl.cdiv(num_row_tiles, ncore)
    n_c_tiles = pl.cdiv(c, tc)

    # Hoisted class-weight gather with the mask folded in. Clamp so negative /
    # out-of-range targets (e.g. ignore_index=-100 under mask=0) never wrap.
    t32 = target.astype(jnp.int32)
    t_ok = (t32 >= 0) & (t32 < c) & (mask != 0)
    wt = jnp.where(t_ok, weight.astype(jnp.float32)[jnp.clip(t32, 0, c - 1)], 0.0)
    t_col = t32.reshape(b, 1)
    wt_col = wt.reshape(b, 1)

    def row_block(ci, ti, cj):
        # clamp: per-core padding tiles re-DMA the last valid block but skip
        # compute in-kernel via the tile_idx guard.
        return (jnp.minimum(ci * steps_per_core + ti, num_row_tiles - 1), cj)

    def row_only(ci, ti, cj):
        return (jnp.minimum(ci * steps_per_core + ti, num_row_tiles - 1), 0)

    kernel = functools.partial(
        _masked_ce_kernel,
        total_rows=b, total_cols=c, num_row_tiles=num_row_tiles,
        row_guard=(ncore * steps_per_core != num_row_tiles),
        row_tail=(b % tb != 0),
        col_tail=(c % tc != 0),
    )

    out = pl.pallas_call(
        kernel,
        grid=(ncore, steps_per_core, n_c_tiles),
        out_shape=jax.ShapeDtypeStruct((ncore, 8, 128), jnp.float32),
        in_specs=[
            pl.BlockSpec((tb, tc), row_block),     # logits, native dtype
            pl.BlockSpec((tb, 1), row_only),       # targets (int32 column)
            pl.BlockSpec((tb, 1), row_only),       # wt = mask * weight[target] (f32)
        ],
        out_specs=pl.BlockSpec((1, 8, 128), lambda ci, ti, cj: (ci, 0, 0)),
        scratch_shapes=[
            pltpu.VMEM((tb, 1), jnp.float32),      # running max
            pltpu.VMEM((tb, 1), jnp.float32),      # running sum-exp
            pltpu.VMEM((tb, 1), jnp.float32),      # running target logit
        ],
        compiler_params=pltpu.CompilerParams(
            dimension_semantics=("parallel", "arbitrary", "arbitrary"),
            vmem_limit_bytes=(48 if is_v7 else 64) * 1024 * 1024,
        ),
    )(logits, t_col, wt_col)

    num_s = jnp.sum(out[:, 0, 0])
    den_s = jnp.sum(out[:, 0, 1])
    any_mask = jnp.any(mask != 0)

    if reduction == "mean":
        # den_s == 0 with a nonzero mask intentionally yields NaN (PyTorch 0/0).
        loss = jnp.where(any_mask, num_s / den_s, jnp.float32(0.0))
    elif reduction == "sum":
        loss = jnp.where(any_mask, num_s, jnp.float32(0.0))
    else:
        raise ValueError(f"unsupported reduction: {reduction}")
    return loss.astype(logits.dtype)


def _reference(logits, target, mask, weight, reduction="mean"):
    # pure-JAX reference of torch cross_entropy(weight=...) over masked rows
    logp = jax.nn.log_softmax(logits.astype(jnp.float32), axis=-1)
    nll = -jnp.take_along_axis(logp, target[:, None].astype(jnp.int32), axis=-1)[:, 0]
    wt = weight.astype(jnp.float32)[target]
    m = mask.astype(jnp.float32)
    if reduction == "mean":
        return jnp.sum(m * wt * nll) / jnp.sum(m * wt)
    return jnp.sum(m * wt * nll)


if __name__ == "__main__":
    key = jax.random.PRNGKey(0)
    kx, kt, km, kx2, kt2, km2 = jax.random.split(key, 6)

    # --- small single-tile case -------------------------------------------
    B, C = 8, 32
    logits = jax.random.normal(kx, (B, C), dtype=jnp.float32)
    target = jax.random.randint(kt, (B,), 0, C, dtype=jnp.int32)
    mask = jax.random.bernoulli(km, 0.6, (B,)).at[0].set(True)
    weight = 0.5 + jnp.arange(C, dtype=jnp.float32) / C

    loss = masked_cross_entropy_loss(logits, target, mask, weight, reduction="mean")
    jax.block_until_ready(loss)
    ref = _reference(logits, target, mask, weight, "mean")
    assert jnp.allclose(loss, ref, atol=1e-5, rtol=1e-5), (loss, ref)

    loss_sum = masked_cross_entropy_loss(logits, target, mask, weight, reduction="sum")
    jax.block_until_ready(loss_sum)
    ref_sum = _reference(logits, target, mask, weight, "sum")
    assert jnp.allclose(loss_sum, ref_sum, atol=1e-5, rtol=1e-5), (loss_sum, ref_sum)

    # bf16 logits (promotion happens lazily in-kernel, no f32 tile copy)
    loss_bf16 = masked_cross_entropy_loss(logits.astype(jnp.bfloat16), target, mask, weight)
    jax.block_until_ready(loss_bf16)
    ref_bf16 = _reference(logits.astype(jnp.bfloat16).astype(jnp.float32), target, mask, weight)
    assert jnp.allclose(loss_bf16.astype(jnp.float32), ref_bf16, atol=3e-2, rtol=3e-2), (
        loss_bf16, ref_bf16)

    # all-zero-mask branch -> 0.0
    zero_loss = masked_cross_entropy_loss(
        logits, target, jnp.zeros((B,), dtype=bool), weight, reduction="mean")
    jax.block_until_ready(zero_loss)
    assert float(zero_loss) == 0.0

    # --- multi-tile case: batch tiles (with padding + tail) and online LSE over C
    B2, C2 = 20, 320
    logits2 = jax.random.normal(kx2, (B2, C2), dtype=jnp.float32)
    target2 = jax.random.randint(kt2, (B2,), 0, C2, dtype=jnp.int32)
    mask2 = jax.random.bernoulli(km2, 0.7, (B2,)).at[3].set(True)
    weight2 = 0.25 + jnp.arange(C2, dtype=jnp.float32) / C2

    loss2 = masked_cross_entropy_loss(logits2, target2, mask2, weight2, reduction="mean",
                                      batch_block=8, c_block=128, ncore=2)
    jax.block_until_ready(loss2)
    ref2 = _reference(logits2, target2, mask2, weight2, "mean")
    assert jnp.allclose(loss2, ref2, atol=1e-5, rtol=1e-5), (loss2, ref2)

    print("KERNEL_OK")
</pallas_src>

<mosaic_0001>
module attributes {stable_mosaic.version = 11 : i64} {
  func.func @_masked_ce_kernel(%arg0: i32, %arg1: i32, %arg2: i32, %arg3: memref<8x32xf32, #tpu.memory_space<vmem>>, %arg4: memref<8x1xi32, #tpu.memory_space<vmem>>, %arg5: memref<8x1xf32, #tpu.memory_space<vmem>>, %arg6: memref<1x8x128xf32, #tpu.memory_space<vmem>>, %arg7: memref<8x1xf32, #tpu.memory_space<vmem>>, %arg8: memref<8x1xf32, #tpu.memory_space<vmem>>, %arg9: memref<8x1xf32, #tpu.memory_space<vmem>>) attributes {dimension_semantics = [#tpu.dimension_semantics<parallel>, #tpu.dimension_semantics<arbitrary>, #tpu.dimension_semantics<arbitrary>], iteration_bounds = array<i64: 1, 1, 1>, scalar_prefetch = 0 : i64, scratch_operands = 3 : i64, tpu.core_type = #tpu.core_type<tc>, window_params = [{transform_indices = @transform_0, window_bounds = array<i64: 8, 32>}, {transform_indices = @transform_1, window_bounds = array<i64: 8, 1>}, {transform_indices = @transform_2, window_bounds = array<i64: 8, 1>}, {transform_indices = @transform_3, window_bounds = array<i64: 1, 8, 128>}]} {
    %c0_i32 = arith.constant 0 : i32
    %0 = arith.cmpi eq, %arg1, %c0_i32 : i32
    %c0_i32_0 = arith.constant 0 : i32
    %1 = arith.cmpi eq, %arg2, %c0_i32_0 : i32
    %2 = arith.andi %0, %1 : i1
    %3 = arith.extui %2 : i1 to i32
    %c0_i32_1 = arith.constant 0 : i32
    %4 = arith.cmpi ne, %3, %c0_i32_1 : i32
    scf.if %4 {
      %cst_24 = arith.constant 0.000000e+00 : f32
      %42 = vector.broadcast %cst_24 : f32 to vector<1x8x128xf32>
      %c0_25 = arith.constant 0 : index
      %c0_26 = arith.constant 0 : index
      %c0_27 = arith.constant 0 : index
      %43 = vector.load %arg6[%c0_25, %c0_26, %c0_27] : memref<1x8x128xf32, #tpu.memory_space<vmem>>, vector<1x8x128xf32>
      tpu.vector_store %arg6[%c0_25, %c0_26, %c0_27], %42 {strides = array<i32>} : memref<1x8x128xf32, #tpu.memory_space<vmem>>, vector<1x8x128xf32>,
    } else {
    }
    %c0 = arith.constant 0 : index
    %c0_2 = arith.constant 0 : index
    %5 = vector.load %arg3[%c0, %c0_2] : memref<8x32xf32, #tpu.memory_space<vmem>>, vector<8x32xf32>
    %c0_3 = arith.constant 0 : index
    %c0_4 = arith.constant 0 : index
    %6 = vector.load %arg4[%c0_3, %c0_4] : memref<8x1xi32, #tpu.memory_space<vmem>>, vector<8x1xi32>
    %c0_i32_5 = arith.constant 0 : i32
    %7 = arith.cmpi eq, %arg2, %c0_i32_5 : i32
    %8 = arith.extui %7 : i1 to i32
    %c0_i32_6 = arith.constant 0 : i32
    %9 = arith.cmpi ne, %8, %c0_i32_6 : i32
    scf.if %9 {
      %cst_24 = arith.constant 0xFF800000 : f32
      %42 = vector.broadcast %cst_24 : f32 to vector<8x1xf32>
      %c0_25 = arith.constant 0 : index
      %c0_26 = arith.constant 0 : index
      %43 = vector.load %arg7[%c0_25, %c0_26] : memref<8x1xf32, #tpu.memory_space<vmem>>, vector<8x1xf32>
      tpu.vector_store %arg7[%c0_25, %c0_26], %42 {strides = array<i32>} : memref<8x1xf32, #tpu.memory_space<vmem>>, vector<8x1xf32>,
      %cst_27 = arith.constant 0.000000e+00 : f32
      %44 = vector.broadcast %cst_27 : f32 to vector<8x1xf32>
      %c0_28 = arith.constant 0 : index
      %c0_29 = arith.constant 0 : index
      %45 = vector.load %arg8[%c0_28, %c0_29] : memref<8x1xf32, #tpu.memory_space<vmem>>, vector<8x1xf32>
      tpu.vector_store %arg8[%c0_28, %c0_29], %44 {strides = array<i32>} : memref<8x1xf32, #tpu.memory_space<vmem>>, vector<8x1xf32>,
      %cst_30 = arith.constant 0.000000e+00 : f32
      %46 = vector.broadcast %cst_30 : f32 to vector<8x1xf32>
      %c0_31 = arith.constant 0 : index
      %c0_32 = arith.constant 0 : index
      %47 = vector.load %arg9[%c0_31, %c0_32] : memref<8x1xf32, #tpu.memory_space<vmem>>, vector<8x1xf32>
      tpu.vector_store %arg9[%c0_31, %c0_32], %46 {strides = array<i32>} : memref<8x1xf32, #tpu.memory_space<vmem>>, vector<8x1xf32>,
    } else {
    }
    %c32_i32 = arith.constant 32 : i32
    %10 = arith.muli %arg2, %c32_i32 : i32
    %11 = tpu.iota {dimensions = array<i32: 1>} : vector<8x32xi32>
    %12 = vector.broadcast %10 : i32 to vector<8x32xi32>
    %13 = arith.addi %12, %11 : vector<8x32xi32>
    %cst = arith.constant dense<0xFF800000> : vector<8xf32>
    %14 = vector.multi_reduction <maximumf>, %5, %cst [1] : vector<8x32xf32> to vector<8xf32>
    %15 = vector.shape_cast %14 : vector<8xf32> to vector<8x1xf32>
    %c0_7 = arith.constant 0 : index
    %c0_8 = arith.constant 0 : index
    %16 = vector.load %arg7[%c0_7, %c0_8] : memref<8x1xf32, #tpu.memory_space<vmem>>, vector<8x1xf32>
    %17 = arith.maximumf %16, %15 : vector<8x1xf32>
    %18 = vector.broadcast %17 : vector<8x1xf32> to vector<8x32xf32>
    %19 = arith.subf %5, %18 : vector<8x32xf32>
    %20 = math.exp %19 : vector<8x32xf32>
    %cst_9 = arith.constant dense<0.000000e+00> : vector<8xf32>
    %21 = vector.multi_reduction <add>, %20, %cst_9 [1] : vector<8x32xf32> to vector<8xf32>
    %22 = vector.shape_cast %21 : vector<8xf32> to vector<8x1xf32>
    %c0_10 = arith.constant 0 : index
    %c0_11 = arith.constant 0 : index
    %23 = vector.load %arg8[%c0_10, %c0_11] : memref<8x1xf32, #tpu.memory_space<vmem>>, vector<8x1xf32>
    %24 = arith.subf %16, %17 : vector<8x1xf32>
    %25 = math.exp %24 : vector<8x1xf32>
    %26 = arith.mulf %23, %25 : vector<8x1xf32>
    %27 = arith.addf %26, %22 : vector<8x1xf32>
    %c0_12 = arith.constant 0 : index
    %c0_13 = arith.constant 0 : index
    %28 = vector.load %arg8[%c0_12, %c0_13] : memref<8x1xf32, #tpu.memory_space<vmem>>, vector<8x1xf32>
    tpu.vector_store %arg8[%c0_12, %c0_13], %27 {strides = array<i32>} : memref<8x1xf32, #tpu.memory_space<vmem>>, vector<8x1xf32>,
    %c0_14 = arith.constant 0 : index
    %c0_15 = arith.constant 0 : index
    %29 = vector.load %arg7[%c0_14, %c0_15] : memref<8x1xf32, #tpu.memory_space<vmem>>, vector<8x1xf32>
    tpu.vector_store %arg7[%c0_14, %c0_15], %17 {strides = array<i32>} : memref<8x1xf32, #tpu.memory_space<vmem>>, vector<8x1xf32>,
    %30 = vector.broadcast %6 : vector<8x1xi32> to vector<8x32xi32>
    %31 = arith.cmpi eq, %13, %30 : vector<8x32xi32>
    %cst_16 = arith.constant 0.000000e+00 : f32
    %32 = vector.broadcast %cst_16 : f32 to vector<8x32xf32>
    %33 = arith.select %31, %5, %32 : vector<8x32xi1>, vector<8x32xf32>
    %c0_17 = arith.constant 0 : index
    %c0_18 = arith.constant 0 : index
    %34 = vector.load %arg9[%c0_17, %c0_18] : memref<8x1xf32, #tpu.memory_space<vmem>>, vector<8x1xf32>
    %cst_19 = arith.constant dense<0.000000e+00> : vector<8xf32>
    %35 = vector.multi_reduction <add>, %33, %cst_19 [1] : vector<8x32xf32> to vector<8xf32>
    %36 = vector.shape_cast %35 : vector<8xf32> to vector<8x1xf32>
    %37 = arith.addf %34, %36 : vector<8x1xf32>
    %c0_20 = arith.constant 0 : index
    %c0_21 = arith.constant 0 : index
    %38 = vector.load %arg9[%c0_20, %c0_21] : memref<8x1xf32, #tpu.memory_space<vmem>>, vector<8x1xf32>
    tpu.vector_store %arg9[%c0_20, %c0_21], %37 {strides = array<i32>} : memref<8x1xf32, #tpu.memory_space<vmem>>, vector<8x1xf32>,
    %c0_i32_22 = arith.constant 0 : i32
    %39 = arith.cmpi eq, %arg2, %c0_i32_22 : i32
    %40 = arith.extui %39 : i1 to i32
    %c0_i32_23 = arith.constant 0 : i32
    %41 = arith.cmpi ne, %40, %c0_i32_23 : i32
    scf.if %41 {
      %c0_24 = arith.constant 0 : index
      %c0_25 = arith.constant 0 : index
      %42 = vector.load %arg7[%c0_24, %c0_25] : memref<8x1xf32, #tpu.memory_space<vmem>>, vector<8x1xf32>
      %c0_26 = arith.constant 0 : index
      %c0_27 = arith.constant 0 : index
      %43 = vector.load %arg8[%c0_26, %c0_27] : memref<8x1xf32, #tpu.memory_space<vmem>>, vector<8x1xf32>
      %44 = math.log %43 : vector<8x1xf32>
      %45 = arith.addf %42, %44 : vector<8x1xf32>
      %c0_28 = arith.constant 0 : index
      %c0_29 = arith.constant 0 : index
      %46 = vector.load %arg9[%c0_28, %c0_29] : memref<8x1xf32, #tpu.memory_space<vmem>>, vector<8x1xf32>
      %47 = arith.subf %45, %46 : vector<8x1xf32>
      %c0_30 = arith.constant 0 : index
      %c0_31 = arith.constant 0 : index
      %48 = vector.load %arg5[%c0_30, %c0_31] : memref<8x1xf32, #tpu.memory_space<vmem>>, vector<8x1xf32>
      %49 = arith.mulf %48, %47 : vector<8x1xf32>
      %50 = vector.shape_cast %49 : vector<8x1xf32> to vector<1x8x1xf32>
      %cst_32 = arith.constant dense<0.000000e+00> : vector<1xf32>
      %51 = vector.multi_reduction <add>, %50, %cst_32 [1, 2] : vector<1x8x1xf32> to vector<1xf32>
      %52 = vector.shape_cast %51 : vector<1xf32> to vector<1x1x1xf32>
      %53 = vector.extract %52[0, 0, 0] : f32 from vector<1x1x1xf32>
      %54 = vector.shape_cast %48 : vector<8x1xf32> to vector<1x8x1xf32>
      %cst_33 = arith.constant dense<0.000000e+00> : vector<1xf32>
      %55 = vector.multi_reduction <add>, %54, %cst_33 [1, 2] : vector<1x8x1xf32> to vector<1xf32>
      %56 = vector.shape_cast %55 : vector<1xf32> to vector<1x1x1xf32>
      %57 = vector.extract %56[0, 0, 0] : f32 from vector<1x1x1xf32>
      %58 = tpu.iota {dimensions = array<i32: 2>} : vector<1x8x128xi32>
      %c0_34 = arith.constant 0 : index
      %c0_35 = arith.constant 0 : index
      %c0_36 = arith.constant 0 : index
      %59 = vector.load %arg6[%c0_34, %c0_35, %c0_36] : memref<1x8x128xf32, #tpu.memory_space<vmem>>, vector<1x8x128xf32>
      %c0_i32_37 = arith.constant 0 : i32
      %60 = vector.broadcast %c0_i32_37 : i32 to vector<1x8x128xi32>
      %61 = arith.cmpi eq, %58, %60 : vector<1x8x128xi32>
      %c1_i32 = arith.constant 1 : i32
      %62 = vector.broadcast %c1_i32 : i32 to vector<1x8x128xi32>
      %63 = arith.cmpi eq, %58, %62 : vector<1x8x128xi32>
      %cst_38 = arith.constant 0.000000e+00 : f32
      %64 = vector.broadcast %57 : f32 to vector<1x8x128xf32>
      %65 = vector.broadcast %cst_38 : f32 to vector<1x8x128xf32>
      %66 = arith.select %63, %64, %65 : vector<1x8x128xi1>, vector<1x8x128xf32>
      %67 = vector.broadcast %53 : f32 to vector<1x8x128xf32>
      %68 = arith.select %61, %67, %66 : vector<1x8x128xi1>, vector<1x8x128xf32>
      %69 = arith.addf %59, %68 : vector<1x8x128xf32>
      %c0_39 = arith.constant 0 : index
      %c0_40 = arith.constant 0 : index
      %c0_41 = arith.constant 0 : index
      %70 = vector.load %arg6[%c0_39, %c0_40, %c0_41] : memref<1x8x128xf32, #tpu.memory_space<vmem>>, vector<1x8x128xf32>
      tpu.vector_store %arg6[%c0_39, %c0_40, %c0_41], %69 {strides = array<i32>} : memref<1x8x128xf32, #tpu.memory_space<vmem>>, vector<1x8x128xf32>,
    } else {
    }
    return
  }
  func.func @transform_0(%arg0: i32, %arg1: i32, %arg2: i32) -> (i32, i32) {
    %c1_i32 = arith.constant 1 : i32
    %0 = arith.muli %arg0, %c1_i32 : i32
    %1 = arith.addi %0, %arg1 : i32
    %c0_i32 = arith.constant 0 : i32
    %2 = arith.minsi %1, %c0_i32 : i32
    %c0_i32_0 = arith.constant 0 : i32
    return %2, %arg2 : i32, i32
  }
  func.func @transform_1(%arg0: i32, %arg1: i32, %arg2: i32) -> (i32, i32) {
    %c1_i32 = arith.constant 1 : i32
    %0 = arith.muli %arg0, %c1_i32 : i32
    %1 = arith.addi %0, %arg1 : i32
    %c0_i32 = arith.constant 0 : i32
    %2 = arith.minsi %1, %c0_i32 : i32
    %c0_i32_0 = arith.constant 0 : i32
    %c0_i32_1 = arith.constant 0 : i32
    return %2, %c0_i32_0 : i32, i32
  }
  func.func @transform_2(%arg0: i32, %arg1: i32, %arg2: i32) -> (i32, i32) {
    %c1_i32 = arith.constant 1 : i32
    %0 = arith.muli %arg0, %c1_i32 : i32
    %1 = arith.addi %0, %arg1 : i32
    %c0_i32 = arith.constant 0 : i32
    %2 = arith.minsi %1, %c0_i32 : i32
    %c0_i32_0 = arith.constant 0 : i32
    %c0_i32_1 = arith.constant 0 : i32
    return %2, %c0_i32_0 : i32, i32
  }
  func.func @transform_3(%arg0: i32, %arg1: i32, %arg2: i32) -> (i32, i32, i32) {
    %c0_i32 = arith.constant 0 : i32
    %c0_i32_0 = arith.constant 0 : i32
    %c0_i32_1 = arith.constant 0 : i32
    return %arg0, %c0_i32, %c0_i32_0 : i32, i32, i32
  }
}

</mosaic_0001>

<llo_original>
// kernel: tpu_custom_call.1
$region0: #{tpu_custom_call.1}
  #allocation0 [shape = 'u32[]', space=smem, size = 0x4, offset = 0x4, fixed_abs, tag = 'smem constant byte address 0x4 - core index']
  #allocation1 [shape = 'u32[72,128]{1,0:T(1,128)}', space=vmem, size = 0x9000, scoped, tag = 'internal scratch']
  #allocation2 [shape = 'f32[8,1]{1,0:T(8,128)}', space=vmem, size = 0x1000, scoped, tag = 'scratch operand']
  #allocation3 [shape = 'f32[8,1]{1,0:T(8,128)}', space=vmem, size = 0x1000, scoped, tag = 'scratch operand']
  #allocation4 [shape = 'f32[8,1]{1,0:T(8,128)}', space=vmem, size = 0x1000, scoped, tag = 'scratch operand']
  %s0 = inlined_call_operand.vmem [shape: f32[8,32], index: 0, kind: input, shape index: {}]
  %s1 = inlined_call_operand.vmem [shape: s32[8,1], index: 1, kind: input, shape index: {}]
  %s2 = inlined_call_operand.vmem [shape: f32[8,1], index: 2, kind: input, shape index: {}]
  %s3 = inlined_call_operand.hbm [shape: f32[1,8,128], index: 3, kind: output, shape index: {}]
  %s4 = sld [smem:[#allocation0]]
  $region34: #{tpu_custom_call.1} parent=0
    _
  %s6 = ssub.s32 1, %s4
  %s7 = scalar_select 0, %s6, %s4
  $region1: #{tpu_custom_call.1} parent=0
    #allocation5 [shape = 'u8[4096]{0}', space=vmem, size = 0x1000, scoped, tag = 'output window, operand 0, single buffered']
    #allocation6 [shape = 's32[1]{0}', space=sflag, size = 0x4, scoped, tag = 'scoped memory for tpu_custom_call.1']
    %8 = vsyncpa [#allocation6], 0
    // Predicated region
    $region2: #{tpu_custom_call.1} parent=1 // pred_check
      _
    $region3: #{tpu_custom_call.1} parent=1 // pred_check_branch
      %10 = sbr.rel (0) target = $region5
    $region4: #{tpu_custom_call.1} parent=1 // pred_region
      %s11 = sadd.s32 0, 0
      %p12 = scmp.lt.s32.totalorder %s11, 0
      %s13 = scalar_select %p12, %s11, 0
      %p14 = scmp.lt.s32.totalorder %s13, 0
      %s15 = scalar_select %p14, %s13, 0
      %s16 = smul.addr %s15, 8
      %s17 = scalar_lea.vmem %s0, %s16
      %s18 = sadd.s32 0, 0
      %p19 = scmp.lt.s32.totalorder %s18, 0
      %s20 = scalar_select %p19, %s18, 0
    $region5: #{tpu_custom_call.1} parent=1 // pred_fallthru
      _
    // Predicated region
    $region6: #{tpu_custom_call.1} parent=1 // pred_check
      _
    $region7: #{tpu_custom_call.1} parent=1 // pred_check_branch
      %22 = sbr.rel (0) target = $region9
    $region8: #{tpu_custom_call.1} parent=1 // pred_region
      %s23 = sadd.s32 0, 0
      %p24 = scmp.lt.s32.totalorder %s23, 0
      %s25 = scalar_select %p24, %s23, 0
      %p26 = scmp.lt.s32.totalorder %s25, 0
      %s27 = scalar_select %p26, %s25, 0
      %s28 = smul.addr %s27, 8
      %s29 = scalar_lea.vmem %s1, %s28
      %s30 = sadd.s32 0, 0
      %p31 = scmp.lt.s32.totalorder %s30, 0
      %s32 = scalar_select %p31, %s30, 0
    $region9: #{tpu_custom_call.1} parent=1 // pred_fallthru
      _
    // Predicated region
    $region10: #{tpu_custom_call.1} parent=1 // pred_check
      _
    $region11: #{tpu_custom_call.1} parent=1 // pred_check_branch
      %34 = sbr.rel (0) target = $region13
    $region12: #{tpu_custom_call.1} parent=1 // pred_region
      %s35 = sadd.s32 0, 0
      %p36 = scmp.lt.s32.totalorder %s35, 0
      %s37 = scalar_select %p36, %s35, 0
      %p38 = scmp.lt.s32.totalorder %s37, 0
      %s39 = scalar_select %p38, %s37, 0
      %s40 = smul.addr %s39, 8
      %s41 = scalar_lea.vmem %s2, %s40
      %s42 = sadd.s32 0, 0
      %p43 = scmp.lt.s32.totalorder %s42, 0
      %s44 = scalar_select %p43, %s42, 0
    $region13: #{tpu_custom_call.1} parent=1 // pred_fallthru
      _
    %s45 = sadd.s32 0, 0
    %p46 = scmp.lt.s32.totalorder %s45, 0
    %s47 = scalar_select %p46, %s45, 0
    %p48 = scmp.lt.s32.totalorder %s47, 0
    %s49 = scalar_select %p48, %s47, 0
    %s50 = smul.addr %s49, 8
    %s51 = scalar_lea.vmem %s0, %s50
    %s52 = sadd.s32 0, 0
    %p53 = scmp.lt.s32.totalorder %s52, 0
    %s54 = scalar_select %p53, %s52, 0
    %p55 = scmp.lt.s32.totalorder %s54, 0
    %s56 = scalar_select %p55, %s54, 0
    %s57 = smul.addr %s56, 8
    %s58 = scalar_lea.vmem %s1, %s57
    %s59 = sadd.s32 0, 0
    %p60 = scmp.lt.s32.totalorder %s59, 0
    %s61 = scalar_select %p60, %s59, 0
    %p62 = scmp.lt.s32.totalorder %s61, 0
    %s63 = scalar_select %p62, %s61, 0
    %s64 = smul.addr %s63, 8
    %s65 = scalar_lea.vmem %s2, %s64
    %s66 = sadd.s32 0, 0
    %p67 = scmp.lt.s32.totalorder %s66, 0
    %s68 = scalar_select %p67, %s66, 0
    %p69 = scmp.lt.s32.totalorder %s68, 0
    %s70 = scalar_select %p69, %s68, 0
    %s71 = smul.addr %s70, 8
    %s72 = scalar_lea.vmem %s0, %s71
    %s73 = sadd.s32 0, 0
    %p74 = scmp.lt.s32.totalorder %s73, 0
    %s75 = scalar_select %p74, %s73, 0
    %s76 = sadd.s32 0, 0
    %p77 = scmp.lt.s32.totalorder %s76, 0
    %s78 = scalar_select %p77, %s76, 0
    %p79 = scmp.lt.s32.totalorder %s78, 0
    %s80 = scalar_select %p79, %s78, 0
    %s81 = smul.addr %s80, 8
    %s82 = scalar_lea.vmem %s1, %s81
    %s83 = sadd.s32 0, 0
    %p84 = scmp.lt.s32.totalorder %s83, 0
    %s85 = scalar_select %p84, %s83, 0
    %s86 = sadd.s32 0, 0
    %p87 = scmp.lt.s32.totalorder %s86, 0
    %s88 = scalar_select %p87, %s86, 0
    %p89 = scmp.lt.s32.totalorder %s88, 0
    %s90 = scalar_select %p89, %s88, 0
    %s91 = smul.addr %s90, 8
    %s92 = scalar_lea.vmem %s2, %s91
    %s93 = sadd.s32 0, 0
    %p94 = scmp.lt.s32.totalorder %s93, 0
    %s95 = scalar_select %p94, %s93, 0
    %p96 = scmp.eq.s32.totalorder 0, 0
    %p97 = scmp.eq.s32.totalorder 0, 0
    %p98 = pnand %p96, %p97
    %p99 = pneg %p98
    // Predicated region
    $region14: #{tpu_custom_call.1} parent=1 // pred_check
      _
    $region15: #{tpu_custom_call.1} parent=1 // pred_check_branch
      %101 = sbr.rel (%p98) target = $region17
    $region16: #{tpu_custom_call.1} parent=1 // pred_region
      %102 = vst [vmem:[#allocation5] sm:$0xff] 0.0
    $region17: #{tpu_custom_call.1} parent=1 // pred_fallthru
      _
    %v103 = vld [vmem:[%s72] sm:$0xff]
    %v104 = vld [vmem:[%s82] sm:$0xff]
    // Predicated region
    $region18: #{tpu_custom_call.1} parent=1 // pred_check
      %p105 = pneg %p97
    $region19: #{tpu_custom_call.1} parent=1 // pred_check_branch
      %107 = sbr.rel (%p105) target = $region21
    $region20: #{tpu_custom_call.1} parent=1 // pred_region
      %vm108 = vcmask 7168
      %109 = vst.msk [vmem:[#allocation2] sm:$0xff] %vm108, -inf
      %110 = vst.msk [vmem:[#allocation3] sm:$0xff] %vm108, 0.0
      %111 = vst.msk [vmem:[#allocation4] sm:$0xff] %vm108, 0.0
    $region21: #{tpu_custom_call.1} parent=1 // pred_fallthru
      _
    %s112 = smul.u32 0, 32
    %v113 = vlaneseq
    %v114 = vand.u32 %v113, 127
    %v115 = vstv %s112
    %v116 = vadd.s32 %v115, %v114
    %vm117 = vcmask 261120
    %v118 = vsel %vm117, %v103, -inf
    %119 = vmax.xlane.f32.xlu0 %v118
    %v120 = vpop.xlane.xlu0 %119
    %v121 = vld [vmem:[#allocation2] sm:$0xff]
    %v122 = vmax.f32 %v121, %v120
    %124 = vset.pattern.permute.xlu0 0
    %125 = vperm.xlu0 %124, %v122
    %v126 = vpop.permute.xlu0 %125
    %v128 = vsub.f32 %v103, %v126
    %v129 = vmul.f32 %v128, 1.442695
    %v130 = vpow.pop %v129
    %v131 = vsel %vm117, %v130, 0.0
    %132 = vadd.xlane.f32.xlu0 %v131
    %v133 = vpop.xlane.xlu0 %132
    %v134 = vld [vmem:[#allocation3] sm:$0xff]
    %v135 = vsub.f32 %v121, %v122
    %v136 = vmul.f32 %v135, 1.442695
    %v137 = vpow.pop %v136
    %v138 = vmul.f32 %v134, %v137
    %v139 = vadd.f32 %v138, %v133
    %vm140 = vcmask 7168
    %141 = vst.msk [vmem:[#allocation3] sm:$0xff] %vm140, %v139
    %142 = vst.msk [vmem:[#allocation2] sm:$0xff] %vm140, %v122
    %143 = vset.pattern.permute.xlu0 0
    %144 = vperm.xlu0 %143, %v104
    %v145 = vpop.permute.xlu0 %144
    %vm146 = vcmp.eq.s32.totalorder %v116, %v145
    %v147 = vsel %vm146, %v103, 0.0
    %v148 = vld [vmem:[#allocation4] sm:$0xff]
    %v149 = vsel %vm117, %v147, 0.0
    %150 = vadd.xlane.f32.xlu0 %v149
    %v151 = vpop.xlane.xlu0 %150
    %v152 = vadd.f32 %v148, %v151
    %153 = vst.msk [vmem:[#allocation4] sm:$0xff] %vm140, %v152
    // Predicated region
    $region22: #{tpu_custom_call.1} parent=1 // pred_check
      %p154 = pneg %p97
    $region23: #{tpu_custom_call.1} parent=1 // pred_check_branch
      %156 = sbr.rel (%p154) target = $region25
    $region24: #{tpu_custom_call.1} parent=1 // pred_region
      %v157 = vld [vmem:[#allocation2] sm:$0xff]
      %v158 = vld [vmem:[#allocation3] sm:$0xff]
      %v159 = vlog2.pop %v158
      %v160 = vmul.f32 %v159, 0.6931472
      %v161 = vadd.f32 %v157, %v160
      %v162 = vld [vmem:[#allocation4] sm:$0xff]
      %v163 = vsub.f32 %v161, %v162
      %v164 = vld [vmem:[%s92] sm:$0xff]
      %v165 = vmul.f32 %v164, %v163
      %v166 = vsel %vm140, %v165, 0.0
      %167 = vadd.xlane.f32.xlu0 %v166
      %v168 = vpop.xlane.xlu0 %167
      %v169 = vrot.slane %v168, 4
      %v170 = vadd.f32 %v168, %v169
      %v171 = vrot.slane %v170, 2
      %v172 = vadd.f32 %v170, %v171
      %v173 = vrot.slane %v172, 1
      %v174 = vadd.f32 %v172, %v173
      %s175 = vtos %v174
      %v176 = vsel %vm140, %v164, 0.0
      %177 = vadd.xlane.f32.xlu0 %v176
      %v178 = vpop.xlane.xlu0 %177
      %v179 = vrot.slane %v178, 4
      %v180 = vadd.f32 %v178, %v179
      %v181 = vrot.slane %v180, 2
      %v182 = vadd.f32 %v180, %v181
      %v183 = vrot.slane %v182, 1
      %v184 = vadd.f32 %v182, %v183
      %s185 = vtos %v184
      %v186 = vld [vmem:[#allocation5] sm:$0xff]
      %vm187 = vcmp.eq.s32.totalorder %v114, 0
      %vm188 = vcmp.eq.s32.totalorder %v114, 1
      %v189 = vstv %s185
      %v190 = vsel %vm188, %v189, 0.0
      %v191 = vstv %s175
      %v192 = vsel %vm187, %v191, %v190
      %v193 = vadd.f32 %v186, %v192
      %194 = vst [vmem:[#allocation5] sm:$0xff] %v193
    $region25: #{tpu_custom_call.1} parent=1 // pred_fallthru
      _
    // Predicated region
    $region26: #{tpu_custom_call.1} parent=1 // pred_check
      _
    $region27: #{tpu_custom_call.1} parent=1 // pred_check_branch
      %196 = sbr.rel (0) target = $region29
    $region28: #{tpu_custom_call.1} parent=1 // pred_region
      %198 = vsyncadd [#allocation6], 0
      %s200 = sshll.u32 [#allocation5], 4
      %s201 = int_to_ptr.vmem [resolvable:$true] %s200
      %s202 = sshll.u32 %s3, 4
      %s203 = int_to_ptr.hbm [resolvable:$true] %s202
      %205 = dma.vmem_to_hbm [thread:$0]  %s201, 128, %s203, [#allocation6]
    $region29: #{tpu_custom_call.1} parent=1 // pred_fallthru
      _
    // Predicated region
    $region30: #{tpu_custom_call.1} parent=1 // pred_check
      _
    $region31: #{tpu_custom_call.1} parent=1 // pred_check_branch
      %207 = sbr.rel (0) target = $region33
    $region32: #{tpu_custom_call.1} parent=1 // pred_region
      %209 = dma.done [#allocation6], 128
    $region33: #{tpu_custom_call.1} parent=1 // pred_fallthru
      _
    %210 = vsyncpa [#allocation6], 1

</llo_original>
